<compile_context>
chip_gen: v7x
topology: tpu7x:2x2x1
jax: 0.10.0
libtpu: 0.0.40
codegen_flags: <defaults>
</compile_context>

<pallas_src>
import jax
import jax.numpy as jnp
from jax.experimental import pallas as pl
from jax.experimental.pallas import tpu as pltpu


def _iou_partial_sums_kernel(m1p_ref, m2_ref, i_ref, s_ref):
    """Accumulate per-row sum(I) and sum(m1)+sum(m2) over spatial chunks."""
    k = pl.program_id(1)  # spatial-chunk (reduction) axis, last in the grid

    @pl.when(k == 0)
    def _():
        i_ref[...] = jnp.zeros_like(i_ref)
        s_ref[...] = jnp.zeros_like(s_ref)

    m1 = jax.nn.sigmoid(m1p_ref[...].astype(jnp.float32))
    m2 = m2_ref[...].astype(jnp.float32)
    # U_sum is reconstructed outside as (sum(m1) + sum(m2)) - I_sum, so the
    # full `union` tile is never materialized (saves VALU passes).
    i_ref[...] += jnp.sum(m1 * m2, axis=-1, keepdims=True)
    s_ref[...] += jnp.sum(m1 + m2, axis=-1, keepdims=True)


def _pick_tile(extent, unit, max_units):
    """Balanced tile size: a multiple of `unit`, at most `unit*max_units`,
    splitting the (unit-rounded) extent as evenly as possible so padding is
    minimal while tiles stay large."""
    units = pl.cdiv(extent, unit)          # extent measured in hardware units
    blocks = pl.cdiv(units, max_units)     # fewest blocks with tile <= cap
    return pl.cdiv(units, blocks) * unit   # balance units across blocks


def pixel_wise_iou_loss(m1_p, m2):
    """Pallas implementation of PixelWiseIoULoss.forward. Returns a scalar."""
    assert m1_p.shape == m2.shape
    B, C, H, W = m1_p.shape
    R = B * C          # rows  = (batch, channel) pairs
    L = H * W          # lanes = flattened spatial

    x1 = m1_p.reshape(R, L)
    x2 = m2.reshape(R, L)

    # --- lane-dense tiles: (<=256, <=2048), (8,128)-aligned, minimal pad ---
    row_tile = _pick_tile(R, 8, 32)        # cap 256 rows
    col_tile = _pick_tile(L, 128, 16)      # cap 2048 lanes
    R_pad = pl.cdiv(R, row_tile) * row_tile
    L_pad = pl.cdiv(L, col_tile) * col_tile

    if (R_pad, L_pad) != (R, L):
        # sigmoid(-1e30) == 0 and mask pad == 0  =>  padding contributes 0
        # to the intersection and to sum(m1)+sum(m2).
        x1 = jnp.pad(x1, ((0, R_pad - R), (0, L_pad - L)),
                     constant_values=-1e30)
        x2 = jnp.pad(x2, ((0, R_pad - R), (0, L_pad - L)),
                     constant_values=0.0)

    grid = (R_pad // row_tile, L_pad // col_tile)

    cost = pl.CostEstimate(
        flops=int(4 * R_pad * L_pad),
        transcendentals=int(R_pad * L_pad),
        bytes_accessed=int(2 * R_pad * L_pad * x1.dtype.itemsize
                           + 2 * R_pad * 4),
    )

    i_sums, s_sums = pl.pallas_call(
        _iou_partial_sums_kernel,
        out_shape=(
            jax.ShapeDtypeStruct((R_pad, 1), jnp.float32),  # sum(I) per row
            jax.ShapeDtypeStruct((R_pad, 1), jnp.float32),  # sum(m1)+sum(m2)
        ),
        grid_spec=pltpu.PrefetchScalarGridSpec(
            num_scalar_prefetch=0,
            grid=grid,
            in_specs=[
                pl.BlockSpec((row_tile, col_tile), lambda r, k: (r, k)),
                pl.BlockSpec((row_tile, col_tile), lambda r, k: (r, k)),
            ],
            out_specs=(
                pl.BlockSpec((row_tile, 1), lambda r, k: (r, 0)),
                pl.BlockSpec((row_tile, 1), lambda r, k: (r, 0)),
            ),
        ),
        compiler_params=pltpu.CompilerParams(
            dimension_semantics=("parallel", "arbitrary"),
        ),
        cost_estimate=cost,
    )(x1, x2)

    # Finalize in plain JAX (negligible work): drop padded rows, recover
    # U_sum, and compute S = 1 - mean(IoU).
    i_sum = i_sums[:R, 0]
    u_sum = s_sums[:R, 0] - i_sum
    iou = i_sum / (u_sum + 1e-08)
    return 1.0 - jnp.mean(iou)


pixel_wise_iou_loss_jit = jax.jit(pixel_wise_iou_loss)


def _reference(m1_p, m2):
    m1 = jax.nn.sigmoid(m1_p)
    inter = m1 * m2
    union = m1 + m2 - inter
    i_sum = jnp.sum(inter, axis=(2, 3))
    u_sum = jnp.sum(union, axis=(2, 3))
    iou = i_sum / (u_sum + 1e-08)
    return 1.0 - jnp.mean(iou)


if __name__ == "__main__":
    key = jax.random.PRNGKey(0)
    k1, k2 = jax.random.split(key)
    B, C, H, W = 2, 4, 16, 16
    m1_p = jax.random.normal(k1, (B, C, H, W), dtype=jnp.float32)
    # m2 is a (soft) mask in [0, 1].
    m2 = jax.random.uniform(k2, (B, C, H, W), dtype=jnp.float32)

    s = pixel_wise_iou_loss_jit(m1_p, m2)
    s = jax.block_until_ready(s)

    s_ref = _reference(m1_p, m2)
    assert jnp.allclose(s, s_ref, atol=1e-5, rtol=1e-5), (s, s_ref)
    print("KERNEL_OK")
</pallas_src>

<mosaic_0001>
module attributes {stable_mosaic.version = 11 : i64} {
  func.func @_iou_partial_sums_kernel(%arg0: i32, %arg1: i32, %arg2: memref<8x256xf32, #tpu.memory_space<vmem>>, %arg3: memref<8x256xf32, #tpu.memory_space<vmem>>, %arg4: memref<8x1xf32, #tpu.memory_space<vmem>>, %arg5: memref<8x1xf32, #tpu.memory_space<vmem>>) attributes {dimension_semantics = [#tpu.dimension_semantics<parallel>, #tpu.dimension_semantics<arbitrary>], iteration_bounds = array<i64: 1, 1>, scalar_prefetch = 0 : i64, scratch_operands = 0 : i64, tpu.core_type = #tpu.core_type<tc>, window_params = [{transform_indices = @transform_0, window_bounds = array<i64: 8, 256>}, {transform_indices = @transform_1, window_bounds = array<i64: 8, 256>}, {transform_indices = @transform_2, window_bounds = array<i64: 8, 1>}, {transform_indices = @transform_3, window_bounds = array<i64: 8, 1>}]} {
    %c0_i32 = arith.constant 0 : i32
    %0 = arith.cmpi eq, %arg1, %c0_i32 : i32
    %1 = arith.extui %0 : i1 to i32
    %c0_i32_0 = arith.constant 0 : i32
    %2 = arith.cmpi ne, %1, %c0_i32_0 : i32
    scf.if %2 {
      %cst_14 = arith.constant 0.000000e+00 : f32
      %22 = vector.broadcast %cst_14 : f32 to vector<8x1xf32>
      %c0_15 = arith.constant 0 : index
      %c0_16 = arith.constant 0 : index
      %23 = vector.load %arg4[%c0_15, %c0_16] : memref<8x1xf32, #tpu.memory_space<vmem>>, vector<8x1xf32>
      tpu.vector_store %arg4[%c0_15, %c0_16], %22 {strides = array<i32>} : memref<8x1xf32, #tpu.memory_space<vmem>>, vector<8x1xf32>,
      %cst_17 = arith.constant 0.000000e+00 : f32
      %24 = vector.broadcast %cst_17 : f32 to vector<8x1xf32>
      %c0_18 = arith.constant 0 : index
      %c0_19 = arith.constant 0 : index
      %25 = vector.load %arg5[%c0_18, %c0_19] : memref<8x1xf32, #tpu.memory_space<vmem>>, vector<8x1xf32>
      tpu.vector_store %arg5[%c0_18, %c0_19], %24 {strides = array<i32>} : memref<8x1xf32, #tpu.memory_space<vmem>>, vector<8x1xf32>,
    } else {
    }
    %c0 = arith.constant 0 : index
    %c0_1 = arith.constant 0 : index
    %3 = vector.load %arg2[%c0, %c0_1] : memref<8x256xf32, #tpu.memory_space<vmem>>, vector<8x256xf32>
    %4 = arith.negf %3 : vector<8x256xf32>
    %5 = math.exp %4 : vector<8x256xf32>
    %cst = arith.constant 1.000000e+00 : f32
    %6 = vector.broadcast %cst : f32 to vector<8x256xf32>
    %7 = arith.addf %6, %5 : vector<8x256xf32>
    %8 = arith.divf %6, %7 : vector<8x256xf32>
    %c0_2 = arith.constant 0 : index
    %c0_3 = arith.constant 0 : index
    %9 = vector.load %arg3[%c0_2, %c0_3] : memref<8x256xf32, #tpu.memory_space<vmem>>, vector<8x256xf32>
    %c0_4 = arith.constant 0 : index
    %c0_5 = arith.constant 0 : index
    %10 = vector.load %arg4[%c0_4, %c0_5] : memref<8x1xf32, #tpu.memory_space<vmem>>, vector<8x1xf32>
    %11 = arith.mulf %8, %9 : vector<8x256xf32>
    %cst_6 = arith.constant dense<0.000000e+00> : vector<8xf32>
    %12 = vector.multi_reduction <add>, %11, %cst_6 [1] : vector<8x256xf32> to vector<8xf32>
    %13 = vector.shape_cast %12 : vector<8xf32> to vector<8x1xf32>
    %14 = arith.addf %10, %13 : vector<8x1xf32>
    %c0_7 = arith.constant 0 : index
    %c0_8 = arith.constant 0 : index
    %15 = vector.load %arg4[%c0_7, %c0_8] : memref<8x1xf32, #tpu.memory_space<vmem>>, vector<8x1xf32>
    tpu.vector_store %arg4[%c0_7, %c0_8], %14 {strides = array<i32>} : memref<8x1xf32, #tpu.memory_space<vmem>>, vector<8x1xf32>,
    %c0_9 = arith.constant 0 : index
    %c0_10 = arith.constant 0 : index
    %16 = vector.load %arg5[%c0_9, %c0_10] : memref<8x1xf32, #tpu.memory_space<vmem>>, vector<8x1xf32>
    %17 = arith.addf %8, %9 : vector<8x256xf32>
    %cst_11 = arith.constant dense<0.000000e+00> : vector<8xf32>
    %18 = vector.multi_reduction <add>, %17, %cst_11 [1] : vector<8x256xf32> to vector<8xf32>
    %19 = vector.shape_cast %18 : vector<8xf32> to vector<8x1xf32>
    %20 = arith.addf %16, %19 : vector<8x1xf32>
    %c0_12 = arith.constant 0 : index
    %c0_13 = arith.constant 0 : index
    %21 = vector.load %arg5[%c0_12, %c0_13] : memref<8x1xf32, #tpu.memory_space<vmem>>, vector<8x1xf32>
    tpu.vector_store %arg5[%c0_12, %c0_13], %20 {strides = array<i32>} : memref<8x1xf32, #tpu.memory_space<vmem>>, vector<8x1xf32>,
    return
  }
  func.func @transform_0(%arg0: i32, %arg1: i32) -> (i32, i32) {
    %c0_i32 = arith.constant 0 : i32
    return %arg0, %arg1 : i32, i32
  }
  func.func @transform_1(%arg0: i32, %arg1: i32) -> (i32, i32) {
    %c0_i32 = arith.constant 0 : i32
    return %arg0, %arg1 : i32, i32
  }
  func.func @transform_2(%arg0: i32, %arg1: i32) -> (i32, i32) {
    %c0_i32 = arith.constant 0 : i32
    %c0_i32_0 = arith.constant 0 : i32
    return %arg0, %c0_i32 : i32, i32
  }
  func.func @transform_3(%arg0: i32, %arg1: i32) -> (i32, i32) {
    %c0_i32 = arith.constant 0 : i32
    %c0_i32_0 = arith.constant 0 : i32
    return %arg0, %c0_i32 : i32, i32
  }
}

</mosaic_0001>

<llo_original>
// kernel: pixel_wise_iou_loss.1
$region0: #{pixel_wise_iou_loss.1}
  #allocation0 [shape = 'u32[]', space=smem, size = 0x4, offset = 0x4, fixed_abs, tag = 'smem constant byte address 0x4 - core index']
  #allocation1 [shape = 'u32[144,128]{1,0:T(1,128)}', space=vmem, size = 0x12000, scoped, tag = 'internal scratch']
  %s0 = inlined_call_operand.vmem [shape: f32[8,256], index: 0, kind: input, shape index: {}]
  %s1 = inlined_call_operand.vmem [shape: f32[8,256], index: 1, kind: input, shape index: {}]
  %s2 = inlined_call_operand.vmem [shape: f32[8,1], index: 2, kind: output, shape index: {0}]
  %s3 = inlined_call_operand.vmem [shape: f32[8,1], index: 3, kind: output, shape index: {1}]
  %4 = xla_tuple %s2, %s3
  %s5 = sld [smem:[#allocation0]]
  $region30: #{pixel_wise_iou_loss.1} parent=0
    _
  %s7 = ssub.s32 1, %s5
  %s8 = scalar_select 0, %s7, %s5
  // Predicated region
  $region2: #{pixel_wise_iou_loss.1} parent=0 // pred_check
    _
  $region3: #{pixel_wise_iou_loss.1} parent=0 // pred_check_branch
    %10 = sbr.rel (0) target = $region5
  $region4: #{pixel_wise_iou_loss.1} parent=0 // pred_region
    _
  $region5: #{pixel_wise_iou_loss.1} parent=0 // pred_fallthru
    _
  // Predicated region
  $region6: #{pixel_wise_iou_loss.1} parent=0 // pred_check
    _
  $region7: #{pixel_wise_iou_loss.1} parent=0 // pred_check_branch
    %12 = sbr.rel (0) target = $region9
  $region8: #{pixel_wise_iou_loss.1} parent=0 // pred_region
    _
  $region9: #{pixel_wise_iou_loss.1} parent=0 // pred_fallthru
    _
  %p13 = scmp.eq.s32.totalorder 0, 0
  // Predicated region
  $region10: #{pixel_wise_iou_loss.1} parent=0 // pred_check
    %p14 = pneg %p13
  $region11: #{pixel_wise_iou_loss.1} parent=0 // pred_check_branch
    %16 = sbr.rel (%p14) target = $region13
  $region12: #{pixel_wise_iou_loss.1} parent=0 // pred_region
    %vm17 = vcmask 7168
    %18 = vst.msk [vmem:[%s2] sm:$0xff] %vm17, 0.0
    %19 = vst.msk [vmem:[%s3] sm:$0xff] %vm17, 0.0
  $region13: #{pixel_wise_iou_loss.1} parent=0 // pred_fallthru
    _
  %v20 = vld [vmem:[%s0] sm:$0xff]
  %v21 = vld [vmem:[%s0 + $0x8] sm:$0xff]
  %v22 = vxor.u32 %v20, 2147483648
  %v23 = vxor.u32 %v21, 2147483648
  %v24 = vmul.f32 %v22, 1.442695
  %v25 = vpow.pop %v24
  %v26 = vmul.f32 %v23, 1.442695
  %v27 = vpow.pop %v26
  %v28 = vadd.f32 %v25, 1.0
  %v29 = vadd.f32 %v27, 1.0
  %v30 = vrcp.pop %v28
  %v31 = vmul.f32 1.0, %v30
  %v32 = vrcp.pop %v29
  %v33 = vmul.f32 1.0, %v32
  %v34 = vld [vmem:[%s1] sm:$0xff]
  %v35 = vld [vmem:[%s1 + $0x8] sm:$0xff]
  %v36 = vld [vmem:[%s2] sm:$0xff]
  %v37 = vmul.f32 %v31, %v34
  %v38 = vmul.f32 %v33, %v35
  %v39 = vadd.f32 %v37, %v38
  %40 = vadd.xlane.f32.xlu0 %v39
  %v41 = vpop.xlane.xlu0 %40
  %v42 = vadd.f32 %v36, %v41
  %vm43 = vcmask 7168
  %44 = vst.msk [vmem:[%s2] sm:$0xff] %vm43, %v42
  %v45 = vld [vmem:[%s3] sm:$0xff]
  %v46 = vadd.f32 %v31, %v34
  %v47 = vadd.f32 %v33, %v35
  %v48 = vadd.f32 %v46, %v47
  %49 = vadd.xlane.f32.xlu0 %v48
  %v50 = vpop.xlane.xlu0 %49
  %v51 = vadd.f32 %v45, %v50
  %52 = vst.msk [vmem:[%s3] sm:$0xff] %vm43, %v51
  // Predicated region
  $region14: #{pixel_wise_iou_loss.1} parent=0 // pred_check
    _
  $region15: #{pixel_wise_iou_loss.1} parent=0 // pred_check_branch
    %54 = sbr.rel (0) target = $region17
  $region16: #{pixel_wise_iou_loss.1} parent=0 // pred_region
    _
  $region17: #{pixel_wise_iou_loss.1} parent=0 // pred_fallthru
    _
  // Predicated region
  $region18: #{pixel_wise_iou_loss.1} parent=0 // pred_check
    _
  $region19: #{pixel_wise_iou_loss.1} parent=0 // pred_check_branch
    %56 = sbr.rel (0) target = $region21
  $region20: #{pixel_wise_iou_loss.1} parent=0 // pred_region
    _
  $region21: #{pixel_wise_iou_loss.1} parent=0 // pred_fallthru
    _
  // Predicated region
  $region22: #{pixel_wise_iou_loss.1} parent=0 // pred_check
    _
  $region23: #{pixel_wise_iou_loss.1} parent=0 // pred_check_branch
    %58 = sbr.rel (0) target = $region25
  $region24: #{pixel_wise_iou_loss.1} parent=0 // pred_region
    _
  $region25: #{pixel_wise_iou_loss.1} parent=0 // pred_fallthru
    _
  // Predicated region
  $region26: #{pixel_wise_iou_loss.1} parent=0 // pred_check
    _
  $region27: #{pixel_wise_iou_loss.1} parent=0 // pred_check_branch
    %60 = sbr.rel (0) target = $region29
  $region28: #{pixel_wise_iou_loss.1} parent=0 // pred_region
    _
  $region29: #{pixel_wise_iou_loss.1} parent=0 // pred_fallthru
    _

</llo_original>
